<compile_context>
chip_gen: v7x
topology: tpu7x:2x2x1
jax: 0.10.0
libtpu: 0.0.40
codegen_flags: <defaults>
</compile_context>

<pallas_src>
import functools

import jax
import jax.numpy as jnp
from jax import lax
from jax.experimental import pallas as pl
from jax.experimental.pallas import tpu as pltpu

T = 8               # timesteps
U = 16              # units
IN_DIM = T * 21     # 168  (fed unpadded; Mosaic masks the K edge internally)
HID = T * U         # 128
OUT_DIM = 7
OUT_PAD = 128       # 7 padded to one full lane tile -> lane-dense (unmasked) store
BN_EPS = 1e-5       # PyTorch BatchNorm1d default
MAX_BM = 4096       # double-buffered tiles stay well under v5e's 16 MiB scoped VMEM


def _round_up(v, m):
    return -(-v // m) * m


def _net_kernel(x_ref, w1_ref, b1_ref, w2_ref, b2_ref, o_ref):
    # fc1 (+ folded BatchNorm): bf16 operands, f32 accumulation on the MXU.
    x = x_ref[...].astype(jnp.bfloat16)
    h = jnp.dot(x, w1_ref[...], preferred_element_type=jnp.float32) + b1_ref[...]

    # act  -- TODO(synk): `act` is undefined in the source module; ReLU assumed.
    h = jnp.maximum(h, 0.0)

    # drop1: Dropout(0.5) is identity at inference time (no-op here).

    # fc2: bf16 operands, f32 accumulation; lane-dense bf16 store.
    y = jnp.dot(h.astype(jnp.bfloat16), w2_ref[...],
                preferred_element_type=jnp.float32) + b2_ref[...]
    o_ref[...] = y.astype(o_ref.dtype)


@functools.partial(jax.jit, static_argnames=("bm",))
def linear_net1b(x, prepared_params, *, bm=1024):
    """x: [B, IN_DIM] float32. Returns [B, OUT_DIM] float32."""
    w1, b1, w2, b2 = prepared_params
    B = x.shape[0]

    # Batch tile: big enough to amortize the ~0.35us/step overhead, small
    # enough that double-buffered tiles fit scoped VMEM on every generation.
    bm_eff = _round_up(min(bm, max(B, 8)), 8)
    bm_eff = min(bm_eff, MAX_BM)
    # Keep >= 2 grid steps when the batch allows it, so v7x megacore can shard
    # the (parallel) batch axis across both TensorCores.
    if B >= 16 and -(-B // bm_eff) < 2:
        bm_eff = _round_up(-(-B // 2), 8)
    B_pad = _round_up(B, bm_eff)

    # Only pad batch rows when the tile doesn't divide B; no feature-dim pad
    # and no dtype cast -> no extra HBM pass over x.
    x_in = x if B_pad == B else jnp.pad(x, ((0, B_pad - B), (0, 0)))

    grid = (B_pad // bm_eff,)

    def x_map(i):
        return (i, 0)

    def const_map(i):
        return (0, 0)

    in_specs = [
        pl.BlockSpec((bm_eff, IN_DIM), x_map),    # x tile (f32, unpadded K=168)
        pl.BlockSpec((IN_DIM, HID), const_map),   # w1 (bf16, BN folded in)
        pl.BlockSpec((1, HID), const_map),        # b1 (f32, BN folded in)
        pl.BlockSpec((HID, OUT_PAD), const_map),  # w2 (bf16, zero-padded cols)
        pl.BlockSpec((1, OUT_PAD), const_map),    # b2 (f32, zero-padded cols)
    ]
    out_specs = pl.BlockSpec((bm_eff, OUT_PAD), x_map)

    out_pad = pl.pallas_call(
        _net_kernel,
        out_shape=jax.ShapeDtypeStruct((B_pad, OUT_PAD), jnp.bfloat16),
        grid_spec=pltpu.PrefetchScalarGridSpec(
            num_scalar_prefetch=0,
            grid=grid,
            in_specs=in_specs,
            out_specs=out_specs,
        ),
        compiler_params=pltpu.CompilerParams(
            dimension_semantics=("parallel",),
            vmem_limit_bytes=32 * 1024 * 1024,   # safe on v5e/v6e/v7x
        ),
    )(x_in, w1, b1, w2, b2)

    # Drop padded batch rows / output columns (tiny plain-JAX glue).
    return out_pad[:B, :OUT_DIM].astype(jnp.float32)


def init_params(key):
    """Raw (unpadded, f32) parameters. Weights stored as [in, out] (transposed
    vs PyTorch) so the kernel computes y = x @ W + b."""
    keys = jax.random.split(key, 8)

    def linear(kw, kb, fan_in, fan_out):
        bound = 1.0 / jnp.sqrt(fan_in)
        w = jax.random.uniform(kw, (fan_in, fan_out), jnp.float32, -bound, bound)
        b = jax.random.uniform(kb, (1, fan_out), jnp.float32, -bound, bound)
        return w, b

    w1, b1 = linear(keys[0], keys[1], IN_DIM, HID)
    w2, b2 = linear(keys[2], keys[3], HID, OUT_DIM)
    # BatchNorm1d params / running stats (nontrivial values for a meaningful test)
    gamma = jax.random.uniform(keys[4], (1, HID), jnp.float32, 0.5, 1.5)
    beta = 0.1 * jax.random.normal(keys[5], (1, HID), jnp.float32)
    mean = 0.1 * jax.random.normal(keys[6], (1, HID), jnp.float32)
    var = jax.random.uniform(keys[7], (1, HID), jnp.float32, 0.5, 1.5)
    return (w1, b1, gamma, beta, mean, var, w2, b2)


def prepare_params(params):
    """One-time host-side prep: fold eval-mode BatchNorm into fc1 (in f32, then
    cast to bf16), zero-pad fc2 to a lane-dense output width."""
    w1, b1, gamma, beta, mean, var, w2, b2 = params
    inv_std = gamma * lax.rsqrt(var + BN_EPS)                 # (1, HID) f32
    w1_fold = (w1 * inv_std).astype(jnp.bfloat16)             # column-wise scale
    b1_fold = (b1 - mean) * inv_std + beta                    # stays f32
    w2_pad = jnp.pad(w2, ((0, 0), (0, OUT_PAD - OUT_DIM))).astype(jnp.bfloat16)
    b2_pad = jnp.pad(b2, ((0, 0), (0, OUT_PAD - OUT_DIM)))    # stays f32
    return (w1_fold, b1_fold, w2_pad, b2_pad)


def reference(x, params):
    """Pure-JAX f32 reference of the original (unfolded) forward pass."""
    w1, b1, gamma, beta, mean, var, w2, b2 = params
    h = x @ w1 + b1
    h = (h - mean) * gamma / jnp.sqrt(var + BN_EPS) + beta
    h = jnp.maximum(h, 0.0)          # assumed ReLU (matches kernel)
    return h @ w2 + b2               # dropout is identity at inference


if __name__ == "__main__":
    key = jax.random.PRNGKey(0)
    k_x, k_p = jax.random.split(key)

    B = 16
    # forward does x.view(-1, t*21); mirror that reshape as plain-JAX glue.
    x_raw = jax.random.normal(k_x, (B, T, 21), jnp.float32)
    x = x_raw.reshape(-1, T * 21)

    params = init_params(k_p)
    prepared = prepare_params(params)

    out = linear_net1b(x, prepared)
    out = jax.block_until_ready(out)

    ref = reference(x, params)
    assert out.shape == (B, OUT_DIM)
    # bf16 matmul operands + folded-BN bf16 weights + bf16 output store,
    # f32 accumulation -> relaxed tolerance vs the f32 reference.
    assert jnp.allclose(out, ref, atol=3e-2, rtol=3e-2), "mismatch vs reference"

    print("KERNEL_OK")
</pallas_src>

<mosaic_0001>
module attributes {stable_mosaic.version = 11 : i64} {
  func.func @_net_kernel(%arg0: i32, %arg1: memref<8x168xf32, #tpu.memory_space<vmem>>, %arg2: memref<168x128xbf16, #tpu.memory_space<vmem>>, %arg3: memref<1x128xf32, #tpu.memory_space<vmem>>, %arg4: memref<128x128xbf16, #tpu.memory_space<vmem>>, %arg5: memref<1x128xf32, #tpu.memory_space<vmem>>, %arg6: memref<8x128xbf16, #tpu.memory_space<vmem>>) attributes {dimension_semantics = [#tpu.dimension_semantics<parallel>], iteration_bounds = array<i64: 2>, scalar_prefetch = 0 : i64, scratch_operands = 0 : i64, tpu.core_type = #tpu.core_type<tc>, window_params = [{transform_indices = @transform_0, window_bounds = array<i64: 8, 168>}, {pipeline_mode = #tpu.pipeline_mode<synchronous>, transform_indices = @transform_1, window_bounds = array<i64: 168, 128>}, {pipeline_mode = #tpu.pipeline_mode<synchronous>, transform_indices = @transform_2, window_bounds = array<i64: 1, 128>}, {pipeline_mode = #tpu.pipeline_mode<synchronous>, transform_indices = @transform_3, window_bounds = array<i64: 128, 128>}, {pipeline_mode = #tpu.pipeline_mode<synchronous>, transform_indices = @transform_4, window_bounds = array<i64: 1, 128>}, {transform_indices = @transform_5, window_bounds = array<i64: 8, 128>}]} {
    %c0 = arith.constant 0 : index
    %c0_0 = arith.constant 0 : index
    %0 = vector.load %arg1[%c0, %c0_0] : memref<8x168xf32, #tpu.memory_space<vmem>>, vector<8x168xf32>
    %1 = arith.truncf %0 : vector<8x168xf32> to vector<8x168xbf16>
    %c0_1 = arith.constant 0 : index
    %c0_2 = arith.constant 0 : index
    %2 = vector.load %arg2[%c0_1, %c0_2] : memref<168x128xbf16, #tpu.memory_space<vmem>>, vector<168x128xbf16>
    %cst = arith.constant dense<0.000000e+00> : vector<8x128xf32>
    %3 = tpu.matmul %1, %2, %cst {dimension_numbers = #tpu.dot_dimension_numbers<[1], [0], [0], [1], [0, 0, 1, 1], [], []>} : vector<8x168xbf16>, vector<168x128xbf16>, vector<8x128xf32> -> vector<8x128xf32>
    %c0_3 = arith.constant 0 : index
    %c0_4 = arith.constant 0 : index
    %4 = vector.load %arg3[%c0_3, %c0_4] : memref<1x128xf32, #tpu.memory_space<vmem>>, vector<1x128xf32>
    %5 = vector.broadcast %4 : vector<1x128xf32> to vector<8x128xf32>
    %6 = arith.addf %3, %5 : vector<8x128xf32>
    %cst_5 = arith.constant 0.000000e+00 : f32
    %7 = vector.broadcast %cst_5 : f32 to vector<8x128xf32>
    %8 = arith.maximumf %6, %7 : vector<8x128xf32>
    %9 = arith.truncf %8 : vector<8x128xf32> to vector<8x128xbf16>
    %c0_6 = arith.constant 0 : index
    %c0_7 = arith.constant 0 : index
    %10 = vector.load %arg4[%c0_6, %c0_7] : memref<128x128xbf16, #tpu.memory_space<vmem>>, vector<128x128xbf16>
    %cst_8 = arith.constant dense<0.000000e+00> : vector<8x128xf32>
    %11 = tpu.matmul %9, %10, %cst_8 {dimension_numbers = #tpu.dot_dimension_numbers<[1], [0], [0], [1], [0, 0, 1, 1], [], []>} : vector<8x128xbf16>, vector<128x128xbf16>, vector<8x128xf32> -> vector<8x128xf32>
    %c0_9 = arith.constant 0 : index
    %c0_10 = arith.constant 0 : index
    %12 = vector.load %arg5[%c0_9, %c0_10] : memref<1x128xf32, #tpu.memory_space<vmem>>, vector<1x128xf32>
    %13 = vector.broadcast %12 : vector<1x128xf32> to vector<8x128xf32>
    %14 = arith.addf %11, %13 : vector<8x128xf32>
    %15 = arith.truncf %14 : vector<8x128xf32> to vector<8x128xbf16>
    %c0_11 = arith.constant 0 : index
    %c0_12 = arith.constant 0 : index
    %16 = vector.load %arg6[%c0_11, %c0_12] : memref<8x128xbf16, #tpu.memory_space<vmem>>, vector<8x128xbf16>
    tpu.vector_store %arg6[%c0_11, %c0_12], %15 {strides = array<i32>} : memref<8x128xbf16, #tpu.memory_space<vmem>>, vector<8x128xbf16>,
    return
  }
  func.func @transform_0(%arg0: i32) -> (i32, i32) {
    %c0_i32 = arith.constant 0 : i32
    %c0_i32_0 = arith.constant 0 : i32
    return %arg0, %c0_i32 : i32, i32
  }
  func.func @transform_1(%arg0: i32) -> (i32, i32) {
    %c0_i32 = arith.constant 0 : i32
    %c0_i32_0 = arith.constant 0 : i32
    %c0_i32_1 = arith.constant 0 : i32
    return %c0_i32, %c0_i32_0 : i32, i32
  }
  func.func @transform_2(%arg0: i32) -> (i32, i32) {
    %c0_i32 = arith.constant 0 : i32
    %c0_i32_0 = arith.constant 0 : i32
    %c0_i32_1 = arith.constant 0 : i32
    return %c0_i32, %c0_i32_0 : i32, i32
  }
  func.func @transform_3(%arg0: i32) -> (i32, i32) {
    %c0_i32 = arith.constant 0 : i32
    %c0_i32_0 = arith.constant 0 : i32
    %c0_i32_1 = arith.constant 0 : i32
    return %c0_i32, %c0_i32_0 : i32, i32
  }
  func.func @transform_4(%arg0: i32) -> (i32, i32) {
    %c0_i32 = arith.constant 0 : i32
    %c0_i32_0 = arith.constant 0 : i32
    %c0_i32_1 = arith.constant 0 : i32
    return %c0_i32, %c0_i32_0 : i32, i32
  }
  func.func @transform_5(%arg0: i32) -> (i32, i32) {
    %c0_i32 = arith.constant 0 : i32
    %c0_i32_0 = arith.constant 0 : i32
    return %arg0, %c0_i32 : i32, i32
  }
}

</mosaic_0001>

<llo_original>
// kernel: linear_net1b.1
$region0: #{linear_net1b.1}
  #allocation0 [shape = 'u32[]', space=smem, size = 0x4, offset = 0x4, fixed_abs, tag = 'smem constant byte address 0x4 - core index']
  #allocation1 [shape = 'u32[144,128]{1,0:T(1,128)}', space=vmem, size = 0x12000, scoped, tag = 'internal scratch']
  %s0 = inlined_call_operand.hbm [shape: f32[16,168], index: 0, kind: input, shape index: {}]
  %s1 = inlined_call_operand.hbm [shape: bf16[168,128], index: 1, kind: input, shape index: {}]
  %s2 = inlined_call_operand.vmem [shape: f32[1,128], index: 2, kind: input, shape index: {}]
  %s3 = inlined_call_operand.hbm [shape: bf16[128,128], index: 3, kind: input, shape index: {}]
  %s4 = inlined_call_operand.vmem [shape: f32[1,128], index: 4, kind: input, shape index: {}]
  %s5 = inlined_call_operand.vmem [shape: bf16[16,128], index: 5, kind: output, shape index: {}]
  %s6 = sld [smem:[#allocation0]]
  $region65: #{linear_net1b.1} parent=0
    _
  %s8 = ssub.s32 1, %s6
  %s9 = scalar_select 0, %s8, %s6
  $region1: #{linear_net1b.1} parent=0
    #allocation2 [shape = 'u8[16384]{0}', space=vmem, size = 0x4000, scoped, tag = 'input window, operand 0']
    #allocation3 [shape = 's32[2]{0}', space=sflag, size = 0x8, scoped, tag = 'scoped memory for linear_net1b.1']
    #allocation4 [shape = 'u8[43008]{0}', space=vmem, size = 0xa800, scoped, tag = 'input window, operand 1, single buffered']
    #allocation5 [shape = 's32[1]{0}', space=sflag, size = 0x4, scoped, tag = 'scoped memory for linear_net1b.1']
    #allocation6 [shape = 'u8[32768]{0}', space=vmem, size = 0x8000, scoped, tag = 'input window, operand 3, single buffered']
    %10 = vsyncpa [#allocation3], 0
    %s11 = scalar_lea.sflag [#allocation3], 1
    %12 = vsyncpa %s11, 0
    %13 = vsyncpa [#allocation5], 0
    loop: start=0, step=1, limit=4
    $region2: #{linear_net1b.1} parent=1 // loop_pre_header
      _
    $region3: #{linear_net1b.1} parent=1 // loop_header
      %s15 = sphi 0, %s19
      %p16 = scmp.ge.s32.totalorder %s15, 4
      %s25 = sphi 0, %s27
      %s28 = sphi 0, %s25
      %s29 = sphi 0, %s28
      %s45 = sphi 0, %s29
      %s49 = sphi 0, %s49
      %s51 = sphi 0, %s49
      %s52 = sphi 0, %s51
      %s66 = sphi 0, %s52
      %s70 = sphi 0, %s70
      %s72 = sphi 0, %s70
      %s73 = sphi 0, %s72
      %s87 = sphi 0, %s73
      %s91 = sphi 0, %s91
      %s93 = sphi 0, %s91
      %s94 = sphi 0, %s93
      %s108 = sphi 0, %s94
      %s112 = sphi 0, %s112
      %s114 = sphi 0, %s112
      %s115 = sphi 0, %s114
      %s129 = sphi 0, %s115
      %s135 = sphi 0, %s137
      %s138 = sphi 0, %s135
      %s139 = sphi 0, %s138
      %s155 = sphi 0, %s139
    $region4: #{linear_net1b.1} parent=1 // loop_header_branch
      %18 = sbr.rel (%p16) target = $region8
    $region5: #{linear_net1b.1} parent=1 // loop_body
      %s20 = ssub.s32 %s15, 1
      %s21 = ssub.s32 %s15, 2
      %s22 = sadd.s32 %s15, 1
      %s23 = ssub.s32 %s15, %s22
      %p24 = scmp.eq.s32.totalorder %s23, 0
      %s26 = sadd.s32 %s25, 1
      %s27 = scalar_select %p24, %s25, %s26
      %p30 = pneg %p24
      %p31 = scmp.eq.s32.totalorder %s15, 1
      %p32 = por %p30, %p31
      %p33 = scmp.ne.s32.totalorder %s25, %s28
      %p34 = scmp.eq.s32.totalorder %s15, 0
      %p35 = por %p33, %p34
      %p36 = scmp.ne.s32.totalorder %s25, %s28
      %p37 = scmp.eq.s32.totalorder %s20, 1
      %p38 = por %p36, %p37
      %p39 = scmp.ne.s32.totalorder %s28, %s29
      %p40 = scmp.eq.s32.totalorder %s20, 0
      %p41 = por %p39, %p40
      %p42 = scmp.ne.s32.totalorder %s28, %s29
      %p43 = scmp.eq.s32.totalorder %s21, 1
      %p44 = por %p42, %p43
      %p46 = scmp.ne.s32.totalorder %s29, %s45
      %p47 = scmp.eq.s32.totalorder %s21, 0
      %p48 = por %p46, %p47
      %s50 = sadd.s32 %s49, 1
      %p53 = scmp.eq.s32.totalorder %s15, 1
      %p54 = scmp.ne.s32.totalorder %s49, %s51
      %p55 = scmp.eq.s32.totalorder %s15, 0
      %p56 = por %p54, %p55
      %p57 = scmp.ne.s32.totalorder %s49, %s51
      %p58 = scmp.eq.s32.totalorder %s20, 1
      %p59 = por %p57, %p58
      %p60 = scmp.ne.s32.totalorder %s51, %s52
      %p61 = scmp.eq.s32.totalorder %s20, 0
      %p62 = por %p60, %p61
      %p63 = scmp.ne.s32.totalorder %s51, %s52
      %p64 = scmp.eq.s32.totalorder %s21, 1
      %p65 = por %p63, %p64
      %p67 = scmp.ne.s32.totalorder %s52, %s66
      %p68 = scmp.eq.s32.totalorder %s21, 0
      %p69 = por %p67, %p68
      %s71 = sadd.s32 %s70, 1
      %p74 = scmp.eq.s32.totalorder %s15, 1
      %p75 = scmp.ne.s32.totalorder %s70, %s72
      %p76 = scmp.eq.s32.totalorder %s15, 0
      %p77 = por %p75, %p76
      %p78 = scmp.ne.s32.totalorder %s70, %s72
      %p79 = scmp.eq.s32.totalorder %s20, 1
      %p80 = por %p78, %p79
      %p81 = scmp.ne.s32.totalorder %s72, %s73
      %p82 = scmp.eq.s32.totalorder %s20, 0
      %p83 = por %p81, %p82
      %p84 = scmp.ne.s32.totalorder %s72, %s73
      %p85 = scmp.eq.s32.totalorder %s21, 1
      %p86 = por %p84, %p85
      %p88 = scmp.ne.s32.totalorder %s73, %s87
      %p89 = scmp.eq.s32.totalorder %s21, 0
      %p90 = por %p88, %p89
      %s92 = sadd.s32 %s91, 1
      %p95 = scmp.eq.s32.totalorder %s15, 1
      %p96 = scmp.ne.s32.totalorder %s91, %s93
      %p97 = scmp.eq.s32.totalorder %s15, 0
      %p98 = por %p96, %p97
      %p99 = scmp.ne.s32.totalorder %s91, %s93
      %p100 = scmp.eq.s32.totalorder %s20, 1
      %p101 = por %p99, %p100
      %p102 = scmp.ne.s32.totalorder %s93, %s94
      %p103 = scmp.eq.s32.totalorder %s20, 0
      %p104 = por %p102, %p103
      %p105 = scmp.ne.s32.totalorder %s93, %s94
      %p106 = scmp.eq.s32.totalorder %s21, 1
      %p107 = por %p105, %p106
      %p109 = scmp.ne.s32.totalorder %s94, %s108
      %p110 = scmp.eq.s32.totalorder %s21, 0
      %p111 = por %p109, %p110
      %s113 = sadd.s32 %s112, 1
      %p116 = scmp.eq.s32.totalorder %s15, 1
      %p117 = scmp.ne.s32.totalorder %s112, %s114
      %p118 = scmp.eq.s32.totalorder %s15, 0
      %p119 = por %p117, %p118
      %p120 = scmp.ne.s32.totalorder %s112, %s114
      %p121 = scmp.eq.s32.totalorder %s20, 1
      %p122 = por %p120, %p121
      %p123 = scmp.ne.s32.totalorder %s114, %s115
      %p124 = scmp.eq.s32.totalorder %s20, 0
      %p125 = por %p123, %p124
      %p126 = scmp.ne.s32.totalorder %s114, %s115
      %p127 = scmp.eq.s32.totalorder %s21, 1
      %p128 = por %p126, %p127
      %p130 = scmp.ne.s32.totalorder %s115, %s129
      %p131 = scmp.eq.s32.totalorder %s21, 0
      %p132 = por %p130, %p131
      %s133 = ssub.s32 %s15, %s22
      %p134 = scmp.eq.s32.totalorder %s133, 0
      %s136 = sadd.s32 %s135, 1
      %s137 = scalar_select %p134, %s135, %s136
      %p140 = pneg %p134
      %p141 = scmp.eq.s32.totalorder %s15, 1
      %p142 = por %p140, %p141
      %p143 = scmp.ne.s32.totalorder %s135, %s138
      %p144 = scmp.eq.s32.totalorder %s15, 0
      %p145 = por %p143, %p144
      %p146 = scmp.ne.s32.totalorder %s135, %s138
      %p147 = scmp.eq.s32.totalorder %s20, 1
      %p148 = por %p146, %p147
      %p149 = scmp.ne.s32.totalorder %s138, %s139
      %p150 = scmp.eq.s32.totalorder %s20, 0
      %p151 = por %p149, %p150
      %p152 = scmp.ne.s32.totalorder %s138, %s139
      %p153 = scmp.eq.s32.totalorder %s21, 1
      %p154 = por %p152, %p153
      %p156 = scmp.ne.s32.totalorder %s139, %s155
      %p157 = scmp.eq.s32.totalorder %s21, 0
      %p158 = por %p156, %p157
      %p159 = scmp.le.s32.totalorder 1, %s15
      %p160 = scmp.lt.s32.totalorder %s15, 3
      %p161 = pnand %p159, %p160
      %p162 = pneg %p161
      // Predicated region
      $region9: #{linear_net1b.1} parent=5 // pred_check
        _
      $region10: #{linear_net1b.1} parent=5 // pred_check_branch
        %164 = sbr.rel (%p161) target = $region12
      $region11: #{linear_net1b.1} parent=5 // pred_region
        %s165 = ssub.s32 %s15, 1
        // Predicated region
        $region13: #{linear_net1b.1} parent=11 // pred_check
          %p166 = pneg %p62
        $region14: #{linear_net1b.1} parent=11 // pred_check_branch
          %168 = sbr.rel (%p166) target = $region16
        $region15: #{linear_net1b.1} parent=11 // pred_region
          %s170 = ssub.s32 1344, 1344
          %171 = vsyncadd [#allocation5], %s170
          %s172 = sshll.u32 [#allocation4], 4
          %s173 = int_to_ptr.vmem [resolvable:$true] %s172
          %178 = dma.hbm_to_vmem [thread:$0]  %s1, 1344, %s173, [#allocation5], 64, 64, 4
        $region16: #{linear_net1b.1} parent=11 // pred_fallthru
          _
        // Predicated region
        $region17: #{linear_net1b.1} parent=11 // pred_check
          %p179 = pneg %p83
        $region18: #{linear_net1b.1} parent=11 // pred_check_branch
          %181 = sbr.rel (%p179) target = $region20
        $region19: #{linear_net1b.1} parent=11 // pred_region
          _
        $region20: #{linear_net1b.1} parent=11 // pred_fallthru
          _
        // Predicated region
        $region21: #{linear_net1b.1} parent=11 // pred_check
          %p182 = pneg %p104
        $region22: #{linear_net1b.1} parent=11 // pred_check_branch
          %184 = sbr.rel (%p182) target = $region24
        $region23: #{linear_net1b.1} parent=11 // pred_region
          %s186 = ssub.s32 1024, 1024
          %187 = vsyncadd [#allocation5], %s186
          %s188 = sshll.u32 [#allocation6], 4
          %s189 = int_to_ptr.vmem [resolvable:$true] %s188
          %194 = dma.hbm_to_vmem [thread:$0]  %s3, 1024, %s189, [#allocation5], 64, 64, 4
        $region24: #{linear_net1b.1} parent=11 // pred_fallthru
          _
        // Predicated region
        $region25: #{linear_net1b.1} parent=11 // pred_check
          %p195 = pneg %p125
        $region26: #{linear_net1b.1} parent=11 // pred_check_branch
          %197 = sbr.rel (%p195) target = $region28
        $region27: #{linear_net1b.1} parent=11 // pred_region
          _
        $region28: #{linear_net1b.1} parent=11 // pred_fallthru
          _
      $region12: #{linear_net1b.1} parent=5 // pred_fallthru
        _
      %p198 = scmp.lt.s32.totalorder %s15, 2
      // Predicated region
      $region29: #{linear_net1b.1} parent=5 // pred_check
        %p199 = pneg %p198
      $region30: #{linear_net1b.1} parent=5 // pred_check_branch
        %201 = sbr.rel (%p199) target = $region32
      $region31: #{linear_net1b.1} parent=5 // pred_region
        // Predicated region
        $region33: #{linear_net1b.1} parent=31 // pred_check
          %p202 = pneg %p35
        $region34: #{linear_net1b.1} parent=31 // pred_check_branch
          %204 = sbr.rel (%p202) target = $region36
        $region35: #{linear_net1b.1} parent=31 // pred_region
          %s205 = sand.u32 %s25, 1
          %s206 = scalar_lea.sflag [#allocation3], %s205
          %s207 = sand.u32 %s25, 1
          %s208 = smul.addr %s207, 16
          %s209 = scalar_lea.vmem [#allocation2], %s208
          %s211 = ssub.s32 256, 256
          %212 = vsyncadd %s206, %s211
          %s213 = smul.addr %s15, 2
          %s214 = smul.addr %s213, 128
          %s215 = scalar_lea.hbm %s0, %s214
          %s217 = sshll.u32 %s209, 4
          %s218 = int_to_ptr.vmem [resolvable:$true] %s217
          %220 = dma.hbm_to_vmem [thread:$0]  %s215, 256, %s218, %s206
        $region36: #{linear_net1b.1} parent=31 // pred_fallthru
          _
      $region32: #{linear_net1b.1} parent=5 // pred_fallthru
        _
      %p221 = scmp.le.s32.totalorder 1, %s15
      %p222 = scmp.lt.s32.totalorder %s15, 3
      %p223 = pnand %p221, %p222
      %p224 = pneg %p223
      // Predicated region
      $region37: #{linear_net1b.1} parent=5 // pred_check
        _
      $region38: #{linear_net1b.1} parent=5 // pred_check_branch
        %226 = sbr.rel (%p223) target = $region40
      $region39: #{linear_net1b.1} parent=5 // pred_region
        %s227 = ssub.s32 %s15, 1
        %s228 = sand.u32 %s28, 1
        %s229 = scalar_lea.sflag [#allocation3], %s228
        %s230 = sand.u32 %s28, 1
        %s231 = smul.addr %s230, 16
        %s232 = scalar_lea.vmem [#allocation2], %s231
        // Predicated region
        $region41: #{linear_net1b.1} parent=39 // pred_check
          %p233 = pneg %p41
        $region42: #{linear_net1b.1} parent=39 // pred_check_branch
          %235 = sbr.rel (%p233) target = $region44
        $region43: #{linear_net1b.1} parent=39 // pred_region
          %236 = dma.done %s229, 256
        $region44: #{linear_net1b.1} parent=39 // pred_fallthru
          _
        // Predicated region
        $region45: #{linear_net1b.1} parent=39 // pred_check
          %p237 = pneg %p62
        $region46: #{linear_net1b.1} parent=39 // pred_check_branch
          %239 = sbr.rel (%p237) target = $region48
        $region47: #{linear_net1b.1} parent=39 // pred_region
          %240 = dma.done [#allocation5], 1344
        $region48: #{linear_net1b.1} parent=39 // pred_fallthru
          _
        // Predicated region
        $region49: #{linear_net1b.1} parent=39 // pred_check
          %p241 = pneg %p104
        $region50: #{linear_net1b.1} parent=39 // pred_check_branch
          %243 = sbr.rel (%p241) target = $region52
        $region51: #{linear_net1b.1} parent=39 // pred_region
          %244 = dma.done [#allocation5], 1024
        $region52: #{linear_net1b.1} parent=39 // pred_fallthru
          _
        %s245 = sand.u32 %s28, 1
        %s246 = scalar_lea.sflag [#allocation3], %s245
        %s247 = sand.u32 %s28, 1
        %s248 = smul.addr %s247, 16
        %s249 = scalar_lea.vmem [#allocation2], %s248
        %p250 = pneg %p41
        %p251 = pneg %p38
        %p252 = pneg %p62
        %p253 = pneg %p59
        %p254 = pneg %p83
        %p255 = pneg %p80
        %p256 = pneg %p104
        %p257 = pneg %p101
        %p258 = pneg %p125
        %p259 = pneg %p122
        %p260 = pneg %p151
        %p261 = pneg %p148
        %p262 = scmp.lt.s32.totalorder %s20, 1
        %s263 = scalar_select %p262, %s20, 1
        %s264 = smul.addr %s263, 4
        %s265 = scalar_lea.vmem %s5, %s264
        %p266 = scmp.lt.s32.totalorder %s20, 1
        %s267 = scalar_select %p266, %s20, 1
        %s268 = smul.addr %s267, 4
        %s269 = scalar_lea.vmem %s5, %s268
        %v271 = vld [vmem:[%s232] sm:$0xff]
        %v272 = vld [vmem:[%s232 + $0x8] sm:$0xff]
        %v273 = vpack.c.bf16 %v271, %v271
        %v274 = vpack.c.bf16 %v272, %v272
        %v275 = vld [vmem:[#allocation4] sm:$0xf]
        %v276 = vld [vmem:[#allocation4 + $0x4] sm:$0xf]
        %v277 = vld [vmem:[#allocation4 + $0x8] sm:$0xf]
        %v278 = vld [vmem:[#allocation4 + $0xc] sm:$0xf]
        %v279 = vld [vmem:[#allocation4 + $0x10] sm:$0xf]
        %v280 = vld [vmem:[#allocation4 + $0x14] sm:$0xf]
        %v281 = vld [vmem:[#allocation4 + $0x18] sm:$0xf]
        %v282 = vld [vmem:[#allocation4 + $0x1c] sm:$0xf]
        %v283 = vld [vmem:[#allocation4 + $0x20] sm:$0xf]
        %v284 = vld [vmem:[#allocation4 + $0x24] sm:$0xf]
        %v285 = vld [vmem:[#allocation4 + $0x28] sm:$0xf]
        %v286 = vld [vmem:[#allocation4 + $0x2c] sm:$0xf]
        %v287 = vld [vmem:[#allocation4 + $0x30] sm:$0xf]
        %v288 = vld [vmem:[#allocation4 + $0x34] sm:$0xf]
        %v289 = vld [vmem:[#allocation4 + $0x38] sm:$0xf]
        %v290 = vld [vmem:[#allocation4 + $0x3c] sm:$0xf]
        %v291 = vld [vmem:[#allocation4 + $0x40] sm:$0xf]
        %v292 = vld [vmem:[#allocation4 + $0x44] sm:$0xf]
        %v293 = vld [vmem:[#allocation4 + $0x48] sm:$0xf]
        %v294 = vld [vmem:[#allocation4 + $0x4c] sm:$0xf]
        %v295 = vld [vmem:[#allocation4 + $0x50] sm:$0xf]
        %v296 = vld [vmem:[%s2] sm:$0x1]
        %v298 = vlaneseq
        %v299 = vshrl.u32 %v298, 7
        %v300 = vsub.s32 0, %v299
        %v301 = vrot.slane %v296, %v300
        %v324 = vunpack.c.l.b16 %v275
        %v325 = vunpack.c.l.b16 %v276
        %v326 = vunpack.c.l.b16 %v277
        %v327 = vunpack.c.l.b16 %v278
        %v328 = vunpack.c.l.b16 %v279
        %v329 = vunpack.c.l.b16 %v280
        %v330 = vunpack.c.l.b16 %v281
        %v331 = vunpack.c.l.b16 %v282
        %v332 = vunpack.c.l.b16 %v283
        %v333 = vunpack.c.l.b16 %v284
        %v334 = vunpack.c.l.b16 %v285
        %v335 = vunpack.c.l.b16 %v286
        %v336 = vunpack.c.l.b16 %v287
        %v337 = vunpack.c.l.b16 %v288
        %v338 = vunpack.c.l.b16 %v289
        %v339 = vunpack.c.l.b16 %v290
        %v340 = vunpack.c.l.b16 %v291
        %v341 = vunpack.c.l.b16 %v292
        %v342 = vunpack.c.l.b16 %v293
        %v343 = vunpack.c.l.b16 %v294
        %v344 = vunpack.c.l.b16 %v295
        %v345 = vpack.c.b16 %v325, %v324
        %v346 = vpack.c.b16 %v327, %v326
        %v347 = vpack.c.b16 %v329, %v328
        %v348 = vpack.c.b16 %v331, %v330
        %v349 = vpack.c.b16 %v333, %v332
        %v350 = vpack.c.b16 %v335, %v334
        %v351 = vpack.c.b16 %v337, %v336
        %v352 = vpack.c.b16 %v339, %v338
        %v353 = vpack.c.b16 %v341, %v340
        %v354 = vpack.c.b16 %v343, %v342
        %v355 = vpack.c.b16 %v344, %v344
        %vm366 = vcmask 326656
        %v368 = vsel %vm366, %v274, 0
        %vm370 = vcmask 1043456
        %v372 = vsel %vm370, %v355, 0
        %374 = vmatprep.subr.bf16.mxu0 0
        %375 = vmatpush1.bf16.msra.mxu0 %v345
        %376 = vmatprep.subr.bf16.mxu0 0
        %377 = vmatpush1.bf16.msra.mxu0 %v346
        %378 = vmatprep.subr.bf16.mxu0 0
        %379 = vmatpush1.bf16.msra.mxu0 %v347
        %380 = vmatprep.subr.bf16.mxu0 0
        %381 = vmatpush1.bf16.msra.mxu0 %v348
        %382 = vmatprep.subr.bf16.mxu0 0
        %383 = vmatpush1.bf16.msra.mxu0 %v349
        %384 = vmatprep.subr.bf16.mxu0 0
        %385 = vmatpush1.bf16.msra.mxu0 %v350
        %386 = vmatprep.subr.bf16.mxu0 0
        %387 = vmatpush1.bf16.msra.mxu0 %v351
        %388 = vmatprep.subr.bf16.mxu0 0
        %389 = vmatpush1.bf16.msra.mxu0 %v352
        %390 = vmatprep.subr.bf16.mxu0 0
        %391 = vmatpush1.bf16.msra.mxu0 %v353
        %392 = vmatprep.subr.bf16.mxu0 0
        %393 = vmatpush1.bf16.msra.mxu0 %v354
        %394 = vmatprep.subr.bf16.mxu0 0
        %395 = vmatpush1.bf16.msra.mxu0 %v372
        %396 = vmatprep.subr.bf16.mxu0 0
        %397 = vmatpush1.bf16.msra.mxu0 0
        %398 = vmatprep.subr.bf16.mxu0 0
        %399 = vmatpush1.bf16.msra.mxu0 0
        %400 = vmatprep.subr.bf16.mxu0 0
        %401 = vmatpush1.bf16.msra.mxu0 0
        %402 = vmatprep.subr.bf16.mxu0 0
        %403 = vmatpush1.bf16.msra.mxu0 0
        %404 = vmatprep.subr.bf16.mxu0 0
        %405 = vmatpush1.bf16.msra.mxu0 0
        %406 = vmatprep.mubr.bf16.mxu0 %v368
        %407 = vmatmul.mubr.bf16.gmra.mrb[0].mxu0 %v273
        %v408 = vpop.f32.mrb[0].mxu0
        %v409 = vadd.f32 %v301, %v408
        %v410 = vpop.f32.mrb[0].mxu0
        %v411 = vpop.f32.mrb[0].mxu0
        %v412 = vpop.f32.mrb[0].mxu0
        %413 = vdwg.mxu0
        %v414 = vmax.f32 %v409, 0.0
        %v415 = vpack.c.bf16 %v414, %v414
        %v416 = vld [vmem:[#allocation6] sm:$0xf]
        %v417 = vld [vmem:[#allocation6 + $0x4] sm:$0xf]
        %v418 = vld [vmem:[#allocation6 + $0x8] sm:$0xf]
        %v419 = vld [vmem:[#allocation6 + $0xc] sm:$0xf]
        %v420 = vld [vmem:[#allocation6 + $0x10] sm:$0xf]
        %v421 = vld [vmem:[#allocation6 + $0x14] sm:$0xf]
        %v422 = vld [vmem:[#allocation6 + $0x18] sm:$0xf]
        %v423 = vld [vmem:[#allocation6 + $0x1c] sm:$0xf]
        %v424 = vld [vmem:[#allocation6 + $0x20] sm:$0xf]
        %v425 = vld [vmem:[#allocation6 + $0x24] sm:$0xf]
        %v426 = vld [vmem:[#allocation6 + $0x28] sm:$0xf]
        %v427 = vld [vmem:[#allocation6 + $0x2c] sm:$0xf]
        %v428 = vld [vmem:[#allocation6 + $0x30] sm:$0xf]
        %v429 = vld [vmem:[#allocation6 + $0x34] sm:$0xf]
        %v430 = vld [vmem:[#allocation6 + $0x38] sm:$0xf]
        %v431 = vld [vmem:[#allocation6 + $0x3c] sm:$0xf]
        %v432 = vld [vmem:[%s4] sm:$0x1]
        %v434 = vlaneseq
        %v435 = vshrl.u32 %v434, 7
        %v436 = vsub.s32 0, %v435
        %v437 = vrot.slane %v432, %v436
        %v455 = vunpack.c.l.b16 %v416
        %v456 = vunpack.c.l.b16 %v417
        %v457 = vunpack.c.l.b16 %v418
        %v458 = vunpack.c.l.b16 %v419
        %v459 = vunpack.c.l.b16 %v420
        %v460 = vunpack.c.l.b16 %v421
        %v461 = vunpack.c.l.b16 %v422
        %v462 = vunpack.c.l.b16 %v423
        %v463 = vunpack.c.l.b16 %v424
        %v464 = vunpack.c.l.b16 %v425
        %v465 = vunpack.c.l.b16 %v426
        %v466 = vunpack.c.l.b16 %v427
        %v467 = vunpack.c.l.b16 %v428
        %v468 = vunpack.c.l.b16 %v429
        %v469 = vunpack.c.l.b16 %v430
        %v470 = vunpack.c.l.b16 %v431
        %v471 = vpack.c.b16 %v456, %v455
        %v472 = vpack.c.b16 %v458, %v457
        %v473 = vpack.c.b16 %v460, %v459
        %v474 = vpack.c.b16 %v462, %v461
        %v475 = vpack.c.b16 %v464, %v463
        %v476 = vpack.c.b16 %v466, %v465
        %v477 = vpack.c.b16 %v468, %v467
        %v478 = vpack.c.b16 %v470, %v469
        %487 = vmatprep.subr.bf16.mxu0 0
        %488 = vmatpush1.bf16.msra.mxu0 %v471
        %489 = vmatprep.subr.bf16.mxu0 0
        %490 = vmatpush1.bf16.msra.mxu0 %v472
        %491 = vmatprep.subr.bf16.mxu0 0
        %492 = vmatpush1.bf16.msra.mxu0 %v473
        %493 = vmatprep.subr.bf16.mxu0 0
        %494 = vmatpush1.bf16.msra.mxu0 %v474
        %495 = vmatprep.subr.bf16.mxu0 0
        %496 = vmatpush1.bf16.msra.mxu0 %v475
        %497 = vmatprep.subr.bf16.mxu0 0
        %498 = vmatpush1.bf16.msra.mxu0 %v476
        %499 = vmatprep.subr.bf16.mxu0 0
        %500 = vmatpush1.bf16.msra.mxu0 %v477
        %501 = vmatprep.subr.bf16.mxu0 0
        %502 = vmatpush1.bf16.msra.mxu0 %v478
        %503 = vmatprep.subr.bf16.mxu0 0
        %504 = vmatpush1.bf16.msra.mxu0 0
        %505 = vmatprep.subr.bf16.mxu0 0
        %506 = vmatpush1.bf16.msra.mxu0 0
        %507 = vmatprep.subr.bf16.mxu0 0
        %508 = vmatpush1.bf16.msra.mxu0 0
        %509 = vmatprep.subr.bf16.mxu0 0
        %510 = vmatpush1.bf16.msra.mxu0 0
        %511 = vmatprep.subr.bf16.mxu0 0
        %512 = vmatpush1.bf16.msra.mxu0 0
        %513 = vmatprep.subr.bf16.mxu0 0
        %514 = vmatpush1.bf16.msra.mxu0 0
        %515 = vmatprep.subr.bf16.mxu0 0
        %516 = vmatpush1.bf16.msra.mxu0 0
        %517 = vmatprep.subr.bf16.mxu0 0
        %518 = vmatpush1.bf16.msra.mxu0 0
        %519 = vmatprep.mubr.bf16.mxu0 0
        %520 = vmatmul.mubr.bf16.gmra.mrb[0].mxu0 %v415
        %v521 = vpop.f32.mrb[0].mxu0
        %v522 = vadd.f32 %v437, %v521
        %v523 = vpop.f32.mrb[0].mxu0
        %v524 = vpop.f32.mrb[0].mxu0
        %v525 = vpop.f32.mrb[0].mxu0
        %526 = vdwg.mxu0
        %v527 = vpack.c.bf16 %v522, %v522
        %528 = vst [vmem:[%s269] sm:$0xf] %v527
        %p529 = scmp.lt.s32.totalorder %s20, 1
        %s530 = scalar_select %p529, %s20, 1
        %s531 = smul.addr %s530, 4
        %s532 = scalar_lea.vmem %s5, %s531
        // Predicated region
        $region53: #{linear_net1b.1} parent=39 // pred_check
          %p533 = pneg %p148
        $region54: #{linear_net1b.1} parent=39 // pred_check_branch
          %535 = sbr.rel (%p533) target = $region56
        $region55: #{linear_net1b.1} parent=39 // pred_region
          _
        $region56: #{linear_net1b.1} parent=39 // pred_fallthru
          _
      $region40: #{linear_net1b.1} parent=5 // pred_fallthru
        _
      %p536 = scmp.le.s32.totalorder 2, %s15
      // Predicated region
      $region57: #{linear_net1b.1} parent=5 // pred_check
        %p537 = pneg %p536
      $region58: #{linear_net1b.1} parent=5 // pred_check_branch
        %539 = sbr.rel (%p537) target = $region60
      $region59: #{linear_net1b.1} parent=5 // pred_region
        %s540 = ssub.s32 %s15, 2
        // Predicated region
        $region61: #{linear_net1b.1} parent=59 // pred_check
          %p541 = pneg %p154
        $region62: #{linear_net1b.1} parent=59 // pred_check_branch
          %543 = sbr.rel (%p541) target = $region64
        $region63: #{linear_net1b.1} parent=59 // pred_region
          %p544 = scmp.lt.s32.totalorder %s21, 1
          %s545 = scalar_select %p544, %s21, 1
          %s546 = smul.addr %s545, 4
          %s547 = scalar_lea.vmem %s5, %s546
        $region64: #{linear_net1b.1} parent=59 // pred_fallthru
          _
      $region60: #{linear_net1b.1} parent=5 // pred_fallthru
        _
    $region6: #{linear_net1b.1} parent=1 // loop_footer
      %s19 = sadd.s32 1, %s15
    $region7: #{linear_net1b.1} parent=1 // loop_footer_branch
      %14 = sbr.rel target = $region3
    $region8: #{linear_net1b.1} parent=1 // loop_exit
      _
    %548 = vsyncpa [#allocation3], 1
    %s549 = scalar_lea.sflag [#allocation3], 1
    %550 = vsyncpa %s549, 1
    %551 = vsyncpa [#allocation5], 1

</llo_original>
